<compile_context>
chip_gen: v6e
topology: v6e:2x2x1
jax: 0.10.0
libtpu: 0.0.40
codegen_flags: <defaults>
</compile_context>

<pallas_src>
import functools

import jax
import jax.numpy as jnp
from jax.experimental import pallas as pl
from jax.experimental.pallas import tpu as pltpu


def _round_up(x: int, m: int) -> int:
    return ((x + m - 1) // m) * m


# --------------------------------------------------------------------------
# Kernels
# --------------------------------------------------------------------------
def _mlp_resident_kernel(x_ref, w1_ref, b1_ref, w2_ref, b2_ref, o_ref, *, mxu_dtype):
    """Both weight matrices resident in VMEM; one batch tile per grid step."""
    # In-kernel cast to the MXU feed dtype (no wrapper-side HBM copy of x/w).
    x = x_ref[...].astype(mxu_dtype)
    w1 = w1_ref[...].astype(mxu_dtype)
    h = jnp.dot(x, w1, preferred_element_type=jnp.float32)
    # Bias + ReLU stay in f32 on the VPU.
    h = jnp.maximum(h + b1_ref[...], 0.0)
    w2 = w2_ref[...].astype(mxu_dtype)
    out = jnp.dot(h.astype(mxu_dtype), w2, preferred_element_type=jnp.float32)
    o_ref[...] = (out + b2_ref[...]).astype(o_ref.dtype)


def _mlp_stream_kernel(x_ref, w1_ref, b1_ref, w2_ref, b2_ref, o_ref, acc_ref,
                       *, mxu_dtype):
    """Weight-streaming fallback: grid=(batch tiles, hidden tiles).

    Each hidden-dim chunk k computes relu(x @ W1[:, k] + b1[k]) and accumulates
    its contribution to the output via W2[k, :] into an f32 scratch.
    """
    k = pl.program_id(1)

    @pl.when(k == 0)
    def _():
        acc_ref[...] = jnp.zeros_like(acc_ref)

    x = x_ref[...].astype(mxu_dtype)
    h = jnp.dot(x, w1_ref[...].astype(mxu_dtype),
                preferred_element_type=jnp.float32)
    h = jnp.maximum(h + b1_ref[...], 0.0)
    acc_ref[...] += jnp.dot(h.astype(mxu_dtype), w2_ref[...].astype(mxu_dtype),
                            preferred_element_type=jnp.float32)

    @pl.when(k == pl.num_programs(1) - 1)
    def _():
        o_ref[...] = (acc_ref[...] + b2_ref[...]).astype(o_ref.dtype)


# --------------------------------------------------------------------------
# Wrapper
# --------------------------------------------------------------------------
def mlp_forward(x, w1, b1, w2, b2, *, tile_b: int = 256, tile_h: int = 512,
                use_bf16_mxu: bool = True, force_stream: bool = False):
    """x: (B, D_in), w1: (D_in, H), b1: (H,), w2: (H, C), b2: (C,) -> (B, C)."""
    B, D_in = x.shape
    H = w1.shape[1]
    C = w2.shape[1]
    out_dtype = x.dtype
    mxu_dtype = jnp.bfloat16 if use_bf16_mxu else jnp.float32

    # Biases as (1, N) f32 rows (added onto the f32 accumulator).
    b1r = b1.reshape(1, H).astype(jnp.float32)
    b2r = b2.reshape(1, C).astype(jnp.float32)

    # ---- batch tiling over the *unpadded* B (partial last block is masked).
    if B <= tile_b:
        tile_b = B                      # single full-dim block
    else:
        steps_target = 4                # >= ~2 grid steps per TC on 2-TC parts
        tile_b = min(tile_b, _round_up(pl.cdiv(B, steps_target), 16))
        tile_b = _round_up(max(tile_b, 16), 16)
    num_b = pl.cdiv(B, tile_b)

    # ---- generation-aware VMEM budget.
    try:
        phys_vmem = int(pltpu.get_tpu_info().vmem_capacity_bytes)
    except Exception:
        phys_vmem = 64 * 1024 * 1024    # conservative (v7x per-TC size)
    vmem_cap = int(phys_vmem * 0.8)     # headroom for Mosaic scratch / spills

    x_isz = jnp.dtype(x.dtype).itemsize
    w_isz = jnp.dtype(w1.dtype).itemsize
    o_isz = jnp.dtype(out_dtype).itemsize
    cast_isz = 2 if mxu_dtype == jnp.bfloat16 else 0

    def _vmem_limit(budget_bytes):
        return int(min(vmem_cap, max(budget_bytes + (8 << 20), 32 << 20)))

    # Resident-path working set (weights get 2 pipeline buffers by default
    # even though their block index never changes).
    resident_bytes = (
        2 * tile_b * D_in * x_isz                 # x tiles (double-buffered)
        + 2 * (D_in * H + H * C) * w_isz          # resident weights (2 buffers)
        + 2 * (H + C) * 4                         # biases
        + 2 * tile_b * C * o_isz                  # out tiles (double-buffered)
        + tile_b * (H + C) * 4                    # f32 intermediates
        + (D_in * H + H * C + tile_b * (D_in + H)) * cast_isz  # bf16 casts
    )

    flops = 2 * B * (D_in * H + H * C)
    bytes_accessed = (B * D_in * x_isz + (D_in * H + H * C) * w_isz
                      + (H + C) * 4 + B * C * o_isz)
    cost = pl.CostEstimate(flops=flops, transcendentals=0,
                           bytes_accessed=bytes_accessed)

    if not force_stream and resident_bytes <= vmem_cap:
        kernel = functools.partial(_mlp_resident_kernel, mxu_dtype=mxu_dtype)
        return pl.pallas_call(
            kernel,
            out_shape=jax.ShapeDtypeStruct((B, C), out_dtype),
            grid_spec=pltpu.PrefetchScalarGridSpec(
                num_scalar_prefetch=0,
                grid=(num_b,),
                in_specs=[
                    pl.BlockSpec((tile_b, D_in), lambda i: (i, 0)),  # x tile
                    pl.BlockSpec((D_in, H), lambda i: (0, 0)),       # w1 resident
                    pl.BlockSpec((1, H), lambda i: (0, 0)),          # b1 resident
                    pl.BlockSpec((H, C), lambda i: (0, 0)),          # w2 resident
                    pl.BlockSpec((1, C), lambda i: (0, 0)),          # b2 resident
                ],
                out_specs=pl.BlockSpec((tile_b, C), lambda i: (i, 0)),
            ),
            compiler_params=pltpu.CompilerParams(
                dimension_semantics=("parallel",),
                vmem_limit_bytes=_vmem_limit(resident_bytes),
            ),
            cost_estimate=cost,
        )(x, w1, b1r, w2, b2r)

    # ------------------------------------------------------------------
    # Streaming fallback: tile the hidden dimension H ("arbitrary" axis).
    # TODO(synk): D_in is not tiled; extremely wide inputs would also need a
    # contraction grid axis over D_in.
    # ------------------------------------------------------------------
    tile_h = max(128, _round_up(min(tile_h, H), 128))

    def _stream_bytes(th):
        return (
            2 * tile_b * D_in * x_isz
            + 2 * (D_in * th + th * C) * w_isz        # streamed weight chunks
            + 2 * (th + C) * 4
            + 2 * tile_b * C * o_isz
            + tile_b * (th + 2 * C) * 4               # h, out, acc scratch
            + (D_in * th + th * C + tile_b * (D_in + th)) * cast_isz
        )

    while tile_h > 128 and _stream_bytes(tile_h) > vmem_cap:
        tile_h //= 2

    # Zero-pad H to a multiple of tile_h (padded cols: bias 0 -> ReLU 0;
    # padded W2 rows are 0, so padding never contaminates the result).
    Hs = _round_up(H, tile_h)
    num_h = Hs // tile_h
    if Hs != H:
        w1 = jnp.zeros((D_in, Hs), w1.dtype).at[:, :H].set(w1)
        b1r = jnp.zeros((1, Hs), jnp.float32).at[:, :H].set(b1r)
        w2 = jnp.zeros((Hs, C), w2.dtype).at[:H, :].set(w2)

    kernel = functools.partial(_mlp_stream_kernel, mxu_dtype=mxu_dtype)
    return pl.pallas_call(
        kernel,
        out_shape=jax.ShapeDtypeStruct((B, C), out_dtype),
        grid_spec=pltpu.PrefetchScalarGridSpec(
            num_scalar_prefetch=0,
            grid=(num_b, num_h),
            in_specs=[
                pl.BlockSpec((tile_b, D_in), lambda i, k: (i, 0)),   # x tile
                pl.BlockSpec((D_in, tile_h), lambda i, k: (0, k)),   # W1 chunk
                pl.BlockSpec((1, tile_h), lambda i, k: (0, k)),      # b1 chunk
                pl.BlockSpec((tile_h, C), lambda i, k: (k, 0)),      # W2 chunk
                pl.BlockSpec((1, C), lambda i, k: (0, 0)),           # b2
            ],
            out_specs=pl.BlockSpec((tile_b, C), lambda i, k: (i, 0)),
            scratch_shapes=[pltpu.VMEM((tile_b, C), jnp.float32)],   # f32 acc
        ),
        compiler_params=pltpu.CompilerParams(
            dimension_semantics=("parallel", "arbitrary"),
            vmem_limit_bytes=_vmem_limit(_stream_bytes(tile_h)),
        ),
        cost_estimate=cost,
    )(x, w1, b1r, w2, b2r)


def init_params(key, input_size, hidden_size, num_classes, dtype=jnp.float32):
    """Deterministic init mirroring nn.Linear shapes (stored transposed)."""
    k1, k2, k3, k4 = jax.random.split(key, 4)
    bound1 = 1.0 / (input_size ** 0.5)
    bound2 = 1.0 / (hidden_size ** 0.5)
    w1 = jax.random.uniform(k1, (input_size, hidden_size), dtype, -bound1, bound1)
    b1 = jax.random.uniform(k2, (hidden_size,), dtype, -bound1, bound1)
    w2 = jax.random.uniform(k3, (hidden_size, num_classes), dtype, -bound2, bound2)
    b2 = jax.random.uniform(k4, (num_classes,), dtype, -bound2, bound2)
    return w1, b1, w2, b2


if __name__ == "__main__":
    input_size, hidden_size, num_classes = 32, 64, 16
    batch = 8

    key = jax.random.PRNGKey(0)
    kx, kp = jax.random.split(key)
    x = jax.random.normal(kx, (batch, input_size), dtype=jnp.float32)
    w1, b1, w2, b2 = init_params(kp, input_size, hidden_size, num_classes)

    fwd = jax.jit(mlp_forward,
                  static_argnames=("tile_b", "tile_h", "use_bf16_mxu", "force_stream"))

    def ref_mlp(x_, w1_, b1_, w2_, b2_):
        return jnp.maximum(x_ @ w1_ + b1_, 0.0) @ w2_ + b2_

    ref = ref_mlp(x, w1, b1, w2, b2)

    # 1) f32 MXU feed: tight check (kernel and reference use the same default
    #    TPU matmul precision).
    out_f32 = jax.block_until_ready(fwd(x, w1, b1, w2, b2, use_bf16_mxu=False))
    assert out_f32.shape == (batch, num_classes)
    assert jnp.allclose(out_f32, ref, atol=1e-5, rtol=1e-5)

    # 2) bf16 MXU feed (f32 accumulation): looser tolerance.
    out_bf16 = jax.block_until_ready(fwd(x, w1, b1, w2, b2, use_bf16_mxu=True))
    assert jnp.allclose(out_bf16, ref, atol=5e-2, rtol=5e-2)

    # 3) Multi-tile batch grid with a partial (masked) last block.
    big_batch = 600
    xb = jax.random.normal(jax.random.PRNGKey(1), (big_batch, input_size),
                           dtype=jnp.float32)
    out_big = jax.block_until_ready(fwd(xb, w1, b1, w2, b2))
    assert out_big.shape == (big_batch, num_classes)
    assert jnp.allclose(out_big, ref_mlp(xb, w1, b1, w2, b2), atol=5e-2, rtol=5e-2)

    # 4) Weight-streaming fallback (hidden-dim grid axis + accumulator).
    hidden_big = 256
    w1s, b1s, w2s, b2s = init_params(jax.random.PRNGKey(2), input_size,
                                     hidden_big, num_classes)
    xs = jax.random.normal(jax.random.PRNGKey(3), (16, input_size),
                           dtype=jnp.float32)
    out_s = jax.block_until_ready(
        fwd(xs, w1s, b1s, w2s, b2s, tile_h=128, force_stream=True))
    assert out_s.shape == (16, num_classes)
    assert jnp.allclose(out_s, ref_mlp(xs, w1s, b1s, w2s, b2s),
                        atol=5e-2, rtol=5e-2)

    print("KERNEL_OK")
</pallas_src>

<mosaic_0001>
module attributes {stable_mosaic.version = 11 : i64} {
  func.func @_mlp_resident_kernel(%arg0: i32, %arg1: memref<8x32xf32, #tpu.memory_space<vmem>>, %arg2: memref<32x64xf32, #tpu.memory_space<vmem>>, %arg3: memref<1x64xf32, #tpu.memory_space<vmem>>, %arg4: memref<64x16xf32, #tpu.memory_space<vmem>>, %arg5: memref<1x16xf32, #tpu.memory_space<vmem>>, %arg6: memref<8x16xf32, #tpu.memory_space<vmem>>) attributes {dimension_semantics = [#tpu.dimension_semantics<parallel>], iteration_bounds = array<i64: 1>, scalar_prefetch = 0 : i64, scratch_operands = 0 : i64, tpu.core_type = #tpu.core_type<tc>, window_params = [{transform_indices = @transform_0, window_bounds = array<i64: 8, 32>}, {pipeline_mode = #tpu.pipeline_mode<synchronous>, transform_indices = @transform_1, window_bounds = array<i64: 32, 64>}, {pipeline_mode = #tpu.pipeline_mode<synchronous>, transform_indices = @transform_2, window_bounds = array<i64: 1, 64>}, {pipeline_mode = #tpu.pipeline_mode<synchronous>, transform_indices = @transform_3, window_bounds = array<i64: 64, 16>}, {pipeline_mode = #tpu.pipeline_mode<synchronous>, transform_indices = @transform_4, window_bounds = array<i64: 1, 16>}, {transform_indices = @transform_5, window_bounds = array<i64: 8, 16>}]} {
    %c0 = arith.constant 0 : index
    %c0_0 = arith.constant 0 : index
    %0 = vector.load %arg1[%c0, %c0_0] : memref<8x32xf32, #tpu.memory_space<vmem>>, vector<8x32xf32>
    %c0_1 = arith.constant 0 : index
    %c0_2 = arith.constant 0 : index
    %1 = vector.load %arg2[%c0_1, %c0_2] : memref<32x64xf32, #tpu.memory_space<vmem>>, vector<32x64xf32>
    %cst = arith.constant dense<0.000000e+00> : vector<8x64xf32>
    %2 = tpu.matmul %0, %1, %cst {dimension_numbers = #tpu.dot_dimension_numbers<[1], [0], [0], [1], [0, 0, 1, 1], [], []>} : vector<8x32xf32>, vector<32x64xf32>, vector<8x64xf32> -> vector<8x64xf32>
    %c0_3 = arith.constant 0 : index
    %c0_4 = arith.constant 0 : index
    %3 = vector.load %arg3[%c0_3, %c0_4] : memref<1x64xf32, #tpu.memory_space<vmem>>, vector<1x64xf32>
    %4 = vector.broadcast %3 : vector<1x64xf32> to vector<8x64xf32>
    %5 = arith.addf %2, %4 : vector<8x64xf32>
    %cst_5 = arith.constant 0.000000e+00 : f32
    %6 = vector.broadcast %cst_5 : f32 to vector<8x64xf32>
    %7 = arith.maximumf %5, %6 : vector<8x64xf32>
    %c0_6 = arith.constant 0 : index
    %c0_7 = arith.constant 0 : index
    %8 = vector.load %arg4[%c0_6, %c0_7] : memref<64x16xf32, #tpu.memory_space<vmem>>, vector<64x16xf32>
    %cst_8 = arith.constant dense<0.000000e+00> : vector<8x16xf32>
    %9 = tpu.matmul %7, %8, %cst_8 {dimension_numbers = #tpu.dot_dimension_numbers<[1], [0], [0], [1], [0, 0, 1, 1], [], []>} : vector<8x64xf32>, vector<64x16xf32>, vector<8x16xf32> -> vector<8x16xf32>
    %c0_9 = arith.constant 0 : index
    %c0_10 = arith.constant 0 : index
    %10 = vector.load %arg5[%c0_9, %c0_10] : memref<1x16xf32, #tpu.memory_space<vmem>>, vector<1x16xf32>
    %11 = vector.broadcast %10 : vector<1x16xf32> to vector<8x16xf32>
    %12 = arith.addf %9, %11 : vector<8x16xf32>
    %c0_11 = arith.constant 0 : index
    %c0_12 = arith.constant 0 : index
    %13 = vector.load %arg6[%c0_11, %c0_12] : memref<8x16xf32, #tpu.memory_space<vmem>>, vector<8x16xf32>
    tpu.vector_store %arg6[%c0_11, %c0_12], %12 {strides = array<i32>} : memref<8x16xf32, #tpu.memory_space<vmem>>, vector<8x16xf32>,
    return
  }
  func.func @transform_0(%arg0: i32) -> (i32, i32) {
    %c0_i32 = arith.constant 0 : i32
    %c0_i32_0 = arith.constant 0 : i32
    return %arg0, %c0_i32 : i32, i32
  }
  func.func @transform_1(%arg0: i32) -> (i32, i32) {
    %c0_i32 = arith.constant 0 : i32
    %c0_i32_0 = arith.constant 0 : i32
    %c0_i32_1 = arith.constant 0 : i32
    return %c0_i32, %c0_i32_0 : i32, i32
  }
  func.func @transform_2(%arg0: i32) -> (i32, i32) {
    %c0_i32 = arith.constant 0 : i32
    %c0_i32_0 = arith.constant 0 : i32
    %c0_i32_1 = arith.constant 0 : i32
    return %c0_i32, %c0_i32_0 : i32, i32
  }
  func.func @transform_3(%arg0: i32) -> (i32, i32) {
    %c0_i32 = arith.constant 0 : i32
    %c0_i32_0 = arith.constant 0 : i32
    %c0_i32_1 = arith.constant 0 : i32
    return %c0_i32, %c0_i32_0 : i32, i32
  }
  func.func @transform_4(%arg0: i32) -> (i32, i32) {
    %c0_i32 = arith.constant 0 : i32
    %c0_i32_0 = arith.constant 0 : i32
    %c0_i32_1 = arith.constant 0 : i32
    return %c0_i32, %c0_i32_0 : i32, i32
  }
  func.func @transform_5(%arg0: i32) -> (i32, i32) {
    %c0_i32 = arith.constant 0 : i32
    %c0_i32_0 = arith.constant 0 : i32
    return %arg0, %c0_i32 : i32, i32
  }
}

</mosaic_0001>

<llo_original>
// kernel: mlp_forward.1
$region0: #{mlp_forward.1}
  #allocation0 [shape = 'u32[]', space=smem, size = 0x4, offset = 0x4, fixed_abs, tag = 'smem constant byte address 0x4 - core index']
  #allocation1 [shape = 'u32[144,128]{1,0:T(1,128)}', space=vmem, size = 0x12000, scoped, tag = 'internal scratch']
  %s0 = inlined_call_operand.vmem [shape: f32[8,32], index: 0, kind: input, shape index: {}]
  %s1 = inlined_call_operand.vmem [shape: f32[32,64], index: 1, kind: input, shape index: {}]
  %s2 = inlined_call_operand.vmem [shape: f32[1,64], index: 2, kind: input, shape index: {}]
  %s3 = inlined_call_operand.vmem [shape: f32[64,16], index: 3, kind: input, shape index: {}]
  %s4 = inlined_call_operand.vmem [shape: f32[1,16], index: 4, kind: input, shape index: {}]
  %s5 = inlined_call_operand.hbm [shape: f32[8,16], index: 5, kind: output, shape index: {}]
  %s6 = sld [smem:[#allocation0]]
  $region30: #{mlp_forward.1} parent=0
    _
  %s8 = ssub.s32 1, %s6
  %s9 = scalar_select 0, %s8, %s6
  $region1: #{mlp_forward.1} parent=0
    #allocation2 [shape = 'u8[4096]{0}', space=vmem, size = 0x1000, scoped, tag = 'output window, operand 0, single buffered']
    #allocation3 [shape = 's32[1]{0}', space=sflag, size = 0x4, scoped, tag = 'scoped memory for mlp_forward.1']
    %10 = vsyncpa [#allocation3], 0
    // Predicated region
    $region2: #{mlp_forward.1} parent=1 // pred_check
      _
    $region3: #{mlp_forward.1} parent=1 // pred_check_branch
      %12 = sbr.rel (0) target = $region5
    $region4: #{mlp_forward.1} parent=1 // pred_region
      _
    $region5: #{mlp_forward.1} parent=1 // pred_fallthru
      _
    // Predicated region
    $region6: #{mlp_forward.1} parent=1 // pred_check
      _
    $region7: #{mlp_forward.1} parent=1 // pred_check_branch
      %14 = sbr.rel (0) target = $region9
    $region8: #{mlp_forward.1} parent=1 // pred_region
      _
    $region9: #{mlp_forward.1} parent=1 // pred_fallthru
      _
    // Predicated region
    $region10: #{mlp_forward.1} parent=1 // pred_check
      _
    $region11: #{mlp_forward.1} parent=1 // pred_check_branch
      %16 = sbr.rel (0) target = $region13
    $region12: #{mlp_forward.1} parent=1 // pred_region
      _
    $region13: #{mlp_forward.1} parent=1 // pred_fallthru
      _
    // Predicated region
    $region14: #{mlp_forward.1} parent=1 // pred_check
      _
    $region15: #{mlp_forward.1} parent=1 // pred_check_branch
      %18 = sbr.rel (0) target = $region17
    $region16: #{mlp_forward.1} parent=1 // pred_region
      _
    $region17: #{mlp_forward.1} parent=1 // pred_fallthru
      _
    // Predicated region
    $region18: #{mlp_forward.1} parent=1 // pred_check
      _
    $region19: #{mlp_forward.1} parent=1 // pred_check_branch
      %20 = sbr.rel (0) target = $region21
    $region20: #{mlp_forward.1} parent=1 // pred_region
      _
    $region21: #{mlp_forward.1} parent=1 // pred_fallthru
      _
    %v21 = vld [vmem:[%s0] sm:$0xff]
    %v22 = vld [vmem:[%s1] sm:$0xff]
    %v23 = vld [vmem:[%s1 + $0x8] sm:$0xff]
    %v24 = vld [vmem:[%s1 + $0x10] sm:$0xff]
    %v25 = vld [vmem:[%s1 + $0x18] sm:$0xff]
    %v26 = vld [vmem:[%s2] sm:$0x1]
    %v28 = vlaneseq
    %v29 = vshrl.u32 %v28, 7
    %v30 = vsub.s32 0, %v29
    %v31 = vrot.slane %v26, %v30
    %vm33 = vcmask 261120
    %v35 = vsel %vm33, %v21, 0
    %37 = vmatprep.subr.mxu0 0.0
    %38 = vmatpush1.msra.mxu0 0.0
    %39 = vmatprep.subr.mxu0 0.0
    %40 = vmatpush1.msra.mxu0 0.0
    %41 = vmatprep.subr.mxu0 0.0
    %42 = vmatpush1.msra.mxu0 0.0
    %43 = vmatprep.subr.mxu0 0.0
    %44 = vmatpush1.msra.mxu0 0.0
    %45 = vmatprep.subr.mxu0 0.0
    %46 = vmatpush1.msra.mxu0 0.0
    %47 = vmatprep.subr.mxu0 0.0
    %48 = vmatpush1.msra.mxu0 0.0
    %49 = vmatprep.subr.mxu0 0.0
    %50 = vmatpush1.msra.mxu0 0.0
    %51 = vmatprep.subr.mxu0 0.0
    %52 = vmatpush1.msra.mxu0 0.0
    %53 = vmatprep.subr.mxu0 0.0
    %54 = vmatpush1.msra.mxu0 0.0
    %55 = vmatprep.subr.mxu0 0.0
    %56 = vmatpush1.msra.mxu0 0.0
    %57 = vmatprep.subr.mxu0 0.0
    %58 = vmatpush1.msra.mxu0 0.0
    %59 = vmatprep.subr.mxu0 0.0
    %60 = vmatpush1.msra.mxu0 0.0
    %61 = vmatprep.subr.mxu0 0.0
    %62 = vmatpush1.msra.mxu0 %v25
    %63 = vmatprep.subr.mxu0 0.0
    %64 = vmatpush1.msra.mxu0 %v24
    %65 = vmatprep.subr.mxu0 0.0
    %66 = vmatpush1.msra.mxu0 %v23
    %67 = vmatprep.subr.mxu0 0.0
    %68 = vmatpush1.msra.mxu0 %v22
    %69 = vmatprep.subr.mxu0 0.0
    %70 = vmatpush2.msra.mxu0 0.0
    %71 = vmatprep.subr.mxu0 0.0
    %72 = vmatpush2.msra.mxu0 0.0
    %73 = vmatprep.subr.mxu0 0.0
    %74 = vmatpush2.msra.mxu0 0.0
    %75 = vmatprep.subr.mxu0 0.0
    %76 = vmatpush2.msra.mxu0 0.0
    %77 = vmatprep.subr.mxu0 0.0
    %78 = vmatpush2.msra.mxu0 0.0
    %79 = vmatprep.subr.mxu0 0.0
    %80 = vmatpush2.msra.mxu0 0.0
    %81 = vmatprep.subr.mxu0 0.0
    %82 = vmatpush2.msra.mxu0 0.0
    %83 = vmatprep.subr.mxu0 0.0
    %84 = vmatpush2.msra.mxu0 0.0
    %85 = vmatprep.subr.mxu0 0.0
    %86 = vmatpush2.msra.mxu0 0.0
    %87 = vmatprep.subr.mxu0 0.0
    %88 = vmatpush2.msra.mxu0 0.0
    %89 = vmatprep.subr.mxu0 0.0
    %90 = vmatpush2.msra.mxu0 0.0
    %91 = vmatprep.subr.mxu0 0.0
    %92 = vmatpush2.msra.mxu0 0.0
    %93 = vmatprep.subr.mxu0 0.0
    %94 = vmatpush2.msra.mxu0 0.0
    %95 = vmatprep.subr.mxu0 0.0
    %96 = vmatpush2.msra.mxu0 0.0
    %97 = vmatprep.subr.mxu0 0.0
    %98 = vmatpush2.msra.mxu0 0.0
    %99 = vmatprep.subr.mxu0 0.0
    %100 = vmatpush2.msra.mxu0 0.0
    %101 = vmatprep.mubr.f32.mxu0 0.0
    %102 = vmatmul.mubr.f32.gmra.mxu0 %v35
    %v103 = vpop.f32.mrf.mxu0
    %v104 = vadd.f32 %v31, %v103
    %v105 = vpop.f32.mrf.mxu0
    %106 = vdwg.mxu0
    %v107 = vmax.f32 %v104, 0.0
    %v108 = vld [vmem:[%s3] sm:$0xff]
    %v109 = vld [vmem:[%s3 + $0x8] sm:$0xff]
    %v110 = vld [vmem:[%s3 + $0x10] sm:$0xff]
    %v111 = vld [vmem:[%s3 + $0x18] sm:$0xff]
    %v112 = vld [vmem:[%s3 + $0x20] sm:$0xff]
    %v113 = vld [vmem:[%s3 + $0x28] sm:$0xff]
    %v114 = vld [vmem:[%s3 + $0x30] sm:$0xff]
    %v115 = vld [vmem:[%s3 + $0x38] sm:$0xff]
    %v116 = vld [vmem:[%s4] sm:$0x1]
    %v118 = vlaneseq
    %v119 = vshrl.u32 %v118, 7
    %v120 = vsub.s32 0, %v119
    %v121 = vrot.slane %v116, %v120
    %vm123 = vcmask 523264
    %v125 = vsel %vm123, %v107, 0
    %127 = vmatprep.subr.mxu0 0.0
    %128 = vmatpush1.msra.mxu0 0.0
    %129 = vmatprep.subr.mxu0 0.0
    %130 = vmatpush1.msra.mxu0 0.0
    %131 = vmatprep.subr.mxu0 0.0
    %132 = vmatpush1.msra.mxu0 0.0
    %133 = vmatprep.subr.mxu0 0.0
    %134 = vmatpush1.msra.mxu0 0.0
    %135 = vmatprep.subr.mxu0 0.0
    %136 = vmatpush1.msra.mxu0 0.0
    %137 = vmatprep.subr.mxu0 0.0
    %138 = vmatpush1.msra.mxu0 0.0
    %139 = vmatprep.subr.mxu0 0.0
    %140 = vmatpush1.msra.mxu0 0.0
    %141 = vmatprep.subr.mxu0 0.0
    %142 = vmatpush1.msra.mxu0 0.0
    %143 = vmatprep.subr.mxu0 0.0
    %144 = vmatpush1.msra.mxu0 %v115
    %145 = vmatprep.subr.mxu0 0.0
    %146 = vmatpush1.msra.mxu0 %v114
    %147 = vmatprep.subr.mxu0 0.0
    %148 = vmatpush1.msra.mxu0 %v113
    %149 = vmatprep.subr.mxu0 0.0
    %150 = vmatpush1.msra.mxu0 %v112
    %151 = vmatprep.subr.mxu0 0.0
    %152 = vmatpush1.msra.mxu0 %v111
    %153 = vmatprep.subr.mxu0 0.0
    %154 = vmatpush1.msra.mxu0 %v110
    %155 = vmatprep.subr.mxu0 0.0
    %156 = vmatpush1.msra.mxu0 %v109
    %157 = vmatprep.subr.mxu0 0.0
    %158 = vmatpush1.msra.mxu0 %v108
    %159 = vmatprep.subr.mxu0 0.0
    %160 = vmatpush2.msra.mxu0 0.0
    %161 = vmatprep.subr.mxu0 0.0
    %162 = vmatpush2.msra.mxu0 0.0
    %163 = vmatprep.subr.mxu0 0.0
    %164 = vmatpush2.msra.mxu0 0.0
    %165 = vmatprep.subr.mxu0 0.0
    %166 = vmatpush2.msra.mxu0 0.0
    %167 = vmatprep.subr.mxu0 0.0
    %168 = vmatpush2.msra.mxu0 0.0
    %169 = vmatprep.subr.mxu0 0.0
    %170 = vmatpush2.msra.mxu0 0.0
    %171 = vmatprep.subr.mxu0 0.0
    %172 = vmatpush2.msra.mxu0 0.0
    %173 = vmatprep.subr.mxu0 0.0
    %174 = vmatpush2.msra.mxu0 0.0
    %175 = vmatprep.subr.mxu0 0.0
    %176 = vmatpush2.msra.mxu0 0.0
    %177 = vmatprep.subr.mxu0 0.0
    %178 = vmatpush2.msra.mxu0 0.0
    %179 = vmatprep.subr.mxu0 0.0
    %180 = vmatpush2.msra.mxu0 0.0
    %181 = vmatprep.subr.mxu0 0.0
    %182 = vmatpush2.msra.mxu0 0.0
    %183 = vmatprep.subr.mxu0 0.0
    %184 = vmatpush2.msra.mxu0 0.0
    %185 = vmatprep.subr.mxu0 0.0
    %186 = vmatpush2.msra.mxu0 0.0
    %187 = vmatprep.subr.mxu0 0.0
    %188 = vmatpush2.msra.mxu0 0.0
    %189 = vmatprep.subr.mxu0 0.0
    %190 = vmatpush2.msra.mxu0 0.0
    %191 = vmatprep.mubr.f32.mxu0 0.0
    %192 = vmatmul.mubr.f32.gmra.mxu0 %v125
    %v193 = vpop.f32.mrf.mxu0
    %v194 = vadd.f32 %v121, %v193
    %v195 = vpop.f32.mrf.mxu0
    %196 = vdwg.mxu0
    %vm197 = vcmask 130048
    %198 = vst.msk [vmem:[#allocation2] sm:$0xff] %vm197, %v194
    // Predicated region
    $region22: #{mlp_forward.1} parent=1 // pred_check
      _
    $region23: #{mlp_forward.1} parent=1 // pred_check_branch
      %200 = sbr.rel (0) target = $region25
    $region24: #{mlp_forward.1} parent=1 // pred_region
      %s202 = ssub.s32 128, 128
      %203 = vsyncadd [#allocation3], %s202
      %s205 = sshll.u32 [#allocation2], 4
      %s206 = int_to_ptr.vmem [resolvable:$true] %s205
      %208 = dma.vmem_to_hbm [thread:$0]  %s206, 128, %s5, [#allocation3]
    $region25: #{mlp_forward.1} parent=1 // pred_fallthru
      _
    // Predicated region
    $region26: #{mlp_forward.1} parent=1 // pred_check
      _
    $region27: #{mlp_forward.1} parent=1 // pred_check_branch
      %210 = sbr.rel (0) target = $region29
    $region28: #{mlp_forward.1} parent=1 // pred_region
      %211 = dma.done [#allocation3], 128
    $region29: #{mlp_forward.1} parent=1 // pred_fallthru
      _
    %212 = vsyncpa [#allocation3], 1

</llo_original>
